<compile_context>
chip_gen: v5e
topology: v5e:2x2
jax: 0.10.0
libtpu: 0.0.40
codegen_flags: <defaults>
</compile_context>

<pallas_src>
import jax
import jax.numpy as jnp
from jax.experimental import pallas as pl
from jax.experimental.pallas import tpu as pltpu


# Per-tile VMEM byte budget (one buffer). With double-buffered input + output
# (4 live buffers) this stays ~8 MiB, safe on v5e/v6e/v7x default scoped VMEM.
_TILE_BYTES = 2 * 1024 * 1024
# Target contiguous output-row length (the S-edge of a tile) in bytes.
_TARGET_ROW_BYTES = 4096


def _transpose_tile_kernel(x_ref, o_ref):
    # Batch dim is squeezed away: x_ref is (ts, td), o_ref is (td, ts).
    # Plain 2-D transpose lowers straight to the XLU transpose unit and is
    # hidden under the HBM DMAs at these tile sizes.
    o_ref[...] = x_ref[...].T


def _transpose_batched_kernel(x_ref, o_ref):
    # x_ref: (tb, S, D); o_ref: (tb, D, S).
    o_ref[...] = jnp.swapaxes(x_ref[...], 1, 2)


def _pick_tiles(S, D, itemsize):
    """Dtype-aware asymmetric tile edges for the tiled path.

    The S-edge (output last dim) targets >= _TARGET_ROW_BYTES of contiguous
    write per DMA row; the D-edge fills the remaining _TILE_BYTES budget.
    Edges are multiples of 128 unless they cover the full dimension (both
    cases satisfy the (8,128)/(16,128)/(32,128) tiling constraints on the
    input block and on the transposed output block).
    """
    budget_elems = _TILE_BYTES // itemsize
    ts_row = max(128, _TARGET_ROW_BYTES // itemsize)      # 1024 f32, 2048 bf16
    ts = S if S <= ts_row else ts_row
    td_cap = max(128, ((budget_elems // max(ts, 1)) // 128) * 128)
    td = D if D <= td_cap else td_cap
    if td == D and ts < S:
        # D fits entirely in one tile: spend the leftover budget lengthening
        # the contiguous output rows (S-edge) instead.
        ts_cap = max(128, ((budget_elems // max(td, 1)) // 128) * 128)
        ts = S if S <= ts_cap else ts_cap
    return ts, td


def transpose_1_2(x, contiguous=False):
    """Pallas equivalent of Transpose(1, 2)(x) for a 3-D input [B, S, D]."""
    # `contiguous` is a no-op: Pallas kernel outputs are always dense.
    del contiguous
    B, S, D = x.shape
    itemsize = jnp.dtype(x.dtype).itemsize
    cost = pl.CostEstimate(
        flops=0, transcendentals=0, bytes_accessed=2 * B * S * D * itemsize
    )

    slab_bytes = S * D * itemsize
    if slab_bytes <= _TILE_BYTES:
        # Batch-folded path: whole (S, D) slabs per grid step, several batch
        # elements per block. Both the input and output DMAs are fully
        # contiguous in HBM and per-step overhead is amortized over tb slabs.
        tb_cap = max(1, min(B, _TILE_BYTES // max(1, slab_bytes)))
        tb = max(t for t in range(1, tb_cap + 1) if B % t == 0)
        return pl.pallas_call(
            _transpose_batched_kernel,
            out_shape=jax.ShapeDtypeStruct((B, D, S), x.dtype),
            grid_spec=pltpu.PrefetchScalarGridSpec(
                num_scalar_prefetch=0,
                grid=(B // tb,),
                in_specs=[pl.BlockSpec((tb, S, D), lambda b: (b, 0, 0))],
                out_specs=pl.BlockSpec((tb, D, S), lambda b: (b, 0, 0)),
            ),
            compiler_params=pltpu.CompilerParams(
                dimension_semantics=("parallel",),
            ),
            cost_estimate=cost,
        )(x)

    # Tiled path: big slabs are streamed tile-by-tile with a squeezed batch
    # dim so the kernel body is a 2-D tile transpose.
    ts, td = _pick_tiles(S, D, itemsize)
    grid = (B, pl.cdiv(S, ts), pl.cdiv(D, td))
    return pl.pallas_call(
        _transpose_tile_kernel,
        out_shape=jax.ShapeDtypeStruct((B, D, S), x.dtype),
        grid_spec=pltpu.PrefetchScalarGridSpec(
            num_scalar_prefetch=0,
            grid=grid,
            in_specs=[
                # Input tile x[b, s*ts:(s+1)*ts, d*td:(d+1)*td]
                pl.BlockSpec((pl.Squeezed(), ts, td), lambda b, s, d: (b, s, d)),
            ],
            # Output tile out[b, d*td:(d+1)*td, s*ts:(s+1)*ts]
            out_specs=pl.BlockSpec((pl.Squeezed(), td, ts), lambda b, s, d: (b, d, s)),
        ),
        compiler_params=pltpu.CompilerParams(
            # Disjoint output block per grid point -> all axes parallel
            # (lets v7x shard across its 2 TensorCores; neutral on v5e/v6e).
            dimension_semantics=("parallel", "parallel", "parallel"),
        ),
        cost_estimate=cost,
    )(x)


class TransposePallas:
    """Mirror of the PyTorch Transpose module (dims restricted to (1, 2))."""

    def __init__(self, *dims, contiguous=False):
        assert tuple(sorted(dims)) == (1, 2), (
            "This Pallas port implements the Transpose(1, 2) case used in "
            "CARD attention."
        )
        self.dims = dims
        self.contiguous = contiguous

    def __call__(self, x):
        return transpose_1_2(x, contiguous=self.contiguous)


if __name__ == "__main__":
    key = jax.random.PRNGKey(0)
    k1, k2, k3 = jax.random.split(key, 3)

    # Small shape consistent with CARD attention activations
    # (exercises the batch-folded path).
    B, S, D = 2, 8, 32
    x = jax.random.normal(k1, (B, S, D), dtype=jnp.float32)

    mod = TransposePallas(1, 2, contiguous=True)
    out = jax.block_until_ready(mod(x))

    ref = jnp.swapaxes(x, 1, 2)
    assert out.shape == (B, D, S), out.shape
    assert out.dtype == x.dtype
    assert jnp.array_equal(out, ref), "mismatch vs reference transpose (small)"

    # Tiled path with edge tiles on both axes (f32: ts=1024, td=512).
    B2, S2, D2 = 2, 1200, 640
    x2 = jax.random.normal(k2, (B2, S2, D2), dtype=jnp.float32)
    out2 = jax.block_until_ready(transpose_1_2(x2))
    assert out2.shape == (B2, D2, S2)
    assert jnp.array_equal(out2, jnp.swapaxes(x2, 1, 2)), (
        "mismatch vs reference transpose (tiled f32)"
    )

    # bf16 tiled path (dtype-aware tiles: ts=2048, td=512) with edge tiles.
    B3, S3, D3 = 2, 2176, 768
    x3 = jax.random.normal(k3, (B3, S3, D3), dtype=jnp.float32).astype(jnp.bfloat16)
    out3 = jax.block_until_ready(transpose_1_2(x3))
    assert out3.shape == (B3, D3, S3)
    assert out3.dtype == jnp.bfloat16
    assert jnp.array_equal(out3, jnp.swapaxes(x3, 1, 2)), (
        "mismatch vs reference transpose (tiled bf16)"
    )

    print("KERNEL_OK")
</pallas_src>

<mosaic_0001>
module attributes {stable_mosaic.version = 11 : i64} {
  func.func @_transpose_batched_kernel(%arg0: i32, %arg1: memref<2x8x32xf32, #tpu.memory_space<vmem>>, %arg2: memref<2x32x8xf32, #tpu.memory_space<vmem>>) attributes {dimension_semantics = [#tpu.dimension_semantics<parallel>], iteration_bounds = array<i64: 1>, scalar_prefetch = 0 : i64, scratch_operands = 0 : i64, tpu.core_type = #tpu.core_type<tc>, window_params = [{transform_indices = @transform_0, window_bounds = array<i64: 2, 8, 32>}, {transform_indices = @transform_1, window_bounds = array<i64: 2, 32, 8>}]} {
    %c0 = arith.constant 0 : index
    %c0_0 = arith.constant 0 : index
    %c0_1 = arith.constant 0 : index
    %0 = vector.load %arg1[%c0, %c0_0, %c0_1] : memref<2x8x32xf32, #tpu.memory_space<vmem>>, vector<2x8x32xf32>
    %1 = tpu.transpose %0, [0, 2, 1] : vector<2x8x32xf32> -> vector<2x32x8xf32>
    %c0_2 = arith.constant 0 : index
    %c0_3 = arith.constant 0 : index
    %c0_4 = arith.constant 0 : index
    %2 = vector.load %arg2[%c0_2, %c0_3, %c0_4] : memref<2x32x8xf32, #tpu.memory_space<vmem>>, vector<2x32x8xf32>
    tpu.vector_store %arg2[%c0_2, %c0_3, %c0_4], %1 {strides = array<i32>} : memref<2x32x8xf32, #tpu.memory_space<vmem>>, vector<2x32x8xf32>,
    return
  }
  func.func @transform_0(%arg0: i32) -> (i32, i32, i32) {
    %c0_i32 = arith.constant 0 : i32
    %c0_i32_0 = arith.constant 0 : i32
    %c0_i32_1 = arith.constant 0 : i32
    return %arg0, %c0_i32, %c0_i32_0 : i32, i32, i32
  }
  func.func @transform_1(%arg0: i32) -> (i32, i32, i32) {
    %c0_i32 = arith.constant 0 : i32
    %c0_i32_0 = arith.constant 0 : i32
    %c0_i32_1 = arith.constant 0 : i32
    return %arg0, %c0_i32, %c0_i32_0 : i32, i32, i32
  }
}

</mosaic_0001>

<llo_original>
// kernel: tpu_custom_call.1
$region0: #{tpu_custom_call.1}
  #allocation0 [shape = 'u32[]', space=smem, size = 0x4, offset = 0x4, fixed_abs, tag = 'smem constant byte address 0x4 - core index']
  #allocation1 [shape = 'u32[72,128]{1,0:T(1,128)}', space=vmem, size = 0x9000, scoped, tag = 'internal scratch']
  %s0 = inlined_call_operand.hbm [shape: f32[2,8,32], index: 0, kind: input, shape index: {}]
  %s1 = inlined_call_operand.vmem [shape: f32[2,32,8], index: 1, kind: output, shape index: {}]
  %s2 = sld [smem:[#allocation0]]
  $region18: #{tpu_custom_call.1} parent=0
    _
  %s4 = ssub.s32 1, %s2
  %s5 = scalar_select 0, %s4, %s2
  $region1: #{tpu_custom_call.1} parent=0
    #allocation2 [shape = 'u8[8192]{0}', space=vmem, size = 0x2000, scoped, tag = 'input window, operand 0, single buffered']
    #allocation3 [shape = 's32[1]{0}', space=sflag, size = 0x4, scoped, tag = 'scoped memory for tpu_custom_call.1']
    %6 = vsyncpa [#allocation3], 0
    // Predicated region
    $region2: #{tpu_custom_call.1} parent=1 // pred_check
      _
    $region3: #{tpu_custom_call.1} parent=1 // pred_check_branch
      %8 = sbr.rel (0) target = $region5
    $region4: #{tpu_custom_call.1} parent=1 // pred_region
      %10 = vsyncadd [#allocation3], 0
      %s11 = sshll.u32 %s0, 4
      %s12 = int_to_ptr.hbm [resolvable:$true] %s11
      %s13 = sshll.u32 [#allocation2], 4
      %s14 = int_to_ptr.vmem [resolvable:$true] %s13
      %19 = dma.hbm_to_vmem [thread:$0]  %s12, 256, %s14, [#allocation3], 128, 128, 8
    $region5: #{tpu_custom_call.1} parent=1 // pred_fallthru
      _
    // Predicated region
    $region6: #{tpu_custom_call.1} parent=1 // pred_check
      _
    $region7: #{tpu_custom_call.1} parent=1 // pred_check_branch
      %21 = sbr.rel (0) target = $region9
    $region8: #{tpu_custom_call.1} parent=1 // pred_region
      %23 = dma.done [#allocation3], 256
    $region9: #{tpu_custom_call.1} parent=1 // pred_fallthru
      _
    %v24 = vld [vmem:[#allocation2] sm:$0xff]
    %v25 = vld [vmem:[#allocation2 + $0x8] sm:$0xff]
    %26 = vxpose.xlu0.b32.start [1/16] %v24, 128
    %27 = vxpose.xlu0.b32.cont [2/16] 0.0, 128
    %28 = vxpose.xlu0.b32.cont [3/16] 0.0, 128
    %29 = vxpose.xlu0.b32.cont [4/16] 0.0, 128
    %30 = vxpose.xlu0.b32.cont [5/16] 0.0, 128
    %31 = vxpose.xlu0.b32.cont [6/16] 0.0, 128
    %32 = vxpose.xlu0.b32.cont [7/16] 0.0, 128
    %33 = vxpose.xlu0.b32.cont [8/16] 0.0, 128
    %34 = vxpose.xlu0.b32.cont [9/16] 0.0, 128
    %35 = vxpose.xlu0.b32.cont [10/16] 0.0, 128
    %36 = vxpose.xlu0.b32.cont [11/16] 0.0, 128
    %37 = vxpose.xlu0.b32.cont [12/16] 0.0, 128
    %38 = vxpose.xlu0.b32.cont [13/16] 0.0, 128
    %39 = vxpose.xlu0.b32.cont [14/16] 0.0, 128
    %40 = vxpose.xlu0.b32.cont [15/16] 0.0, 128
    %41 = vxpose.xlu0.b32.end [16/16] 0.0, 128
    %v42 = vpop.trf.xlu0
    %v43 = vpop.trf.xlu0
    %v44 = vpop.trf.xlu0
    %v45 = vpop.trf.xlu0
    %v46 = vpop.trf.xlu0
    %v47 = vpop.trf.xlu0
    %v48 = vpop.trf.xlu0
    %v49 = vpop.trf.xlu0
    %v50 = vpop.trf.xlu0
    %v51 = vpop.trf.xlu0
    %v52 = vpop.trf.xlu0
    %v53 = vpop.trf.xlu0
    %v54 = vpop.trf.xlu0
    %v55 = vpop.trf.xlu0
    %v56 = vpop.trf.xlu0
    %v57 = vpop.trf.xlu0
    %58 = vxpose.xlu0.b32.start [1/16] %v25, 128
    %59 = vxpose.xlu0.b32.cont [2/16] 0.0, 128
    %60 = vxpose.xlu0.b32.cont [3/16] 0.0, 128
    %61 = vxpose.xlu0.b32.cont [4/16] 0.0, 128
    %62 = vxpose.xlu0.b32.cont [5/16] 0.0, 128
    %63 = vxpose.xlu0.b32.cont [6/16] 0.0, 128
    %64 = vxpose.xlu0.b32.cont [7/16] 0.0, 128
    %65 = vxpose.xlu0.b32.cont [8/16] 0.0, 128
    %66 = vxpose.xlu0.b32.cont [9/16] 0.0, 128
    %67 = vxpose.xlu0.b32.cont [10/16] 0.0, 128
    %68 = vxpose.xlu0.b32.cont [11/16] 0.0, 128
    %69 = vxpose.xlu0.b32.cont [12/16] 0.0, 128
    %70 = vxpose.xlu0.b32.cont [13/16] 0.0, 128
    %71 = vxpose.xlu0.b32.cont [14/16] 0.0, 128
    %72 = vxpose.xlu0.b32.cont [15/16] 0.0, 128
    %73 = vxpose.xlu0.b32.end [16/16] 0.0, 128
    %v74 = vpop.trf.xlu0
    %v75 = vpop.trf.xlu0
    %v76 = vpop.trf.xlu0
    %v77 = vpop.trf.xlu0
    %v78 = vpop.trf.xlu0
    %v79 = vpop.trf.xlu0
    %v80 = vpop.trf.xlu0
    %v81 = vpop.trf.xlu0
    %v82 = vpop.trf.xlu0
    %v83 = vpop.trf.xlu0
    %v84 = vpop.trf.xlu0
    %v85 = vpop.trf.xlu0
    %v86 = vpop.trf.xlu0
    %v87 = vpop.trf.xlu0
    %v88 = vpop.trf.xlu0
    %v89 = vpop.trf.xlu0
    %vm90 = vcmask 64512
    %91 = vst.msk [vmem:[%s1] sm:$0xff] %vm90, %v42
    %92 = vst.msk [vmem:[%s1 + $0x8] sm:$0xff] %vm90, %v43
    %93 = vst.msk [vmem:[%s1 + $0x10] sm:$0xff] %vm90, %v44
    %94 = vst.msk [vmem:[%s1 + $0x18] sm:$0xff] %vm90, %v45
    %95 = vst.msk [vmem:[%s1 + $0x20] sm:$0xff] %vm90, %v74
    %96 = vst.msk [vmem:[%s1 + $0x28] sm:$0xff] %vm90, %v75
    %97 = vst.msk [vmem:[%s1 + $0x30] sm:$0xff] %vm90, %v76
    %98 = vst.msk [vmem:[%s1 + $0x38] sm:$0xff] %vm90, %v77
    // Predicated region
    $region10: #{tpu_custom_call.1} parent=1 // pred_check
      _
    $region11: #{tpu_custom_call.1} parent=1 // pred_check_branch
      %100 = sbr.rel (0) target = $region13
    $region12: #{tpu_custom_call.1} parent=1 // pred_region
      _
    $region13: #{tpu_custom_call.1} parent=1 // pred_fallthru
      _
    // Predicated region
    $region14: #{tpu_custom_call.1} parent=1 // pred_check
      _
    $region15: #{tpu_custom_call.1} parent=1 // pred_check_branch
      %102 = sbr.rel (0) target = $region17
    $region16: #{tpu_custom_call.1} parent=1 // pred_region
      _
    $region17: #{tpu_custom_call.1} parent=1 // pred_fallthru
      _
    %103 = vsyncpa [#allocation3], 1

</llo_original>
